<compile_context>
chip_gen: v5e
topology: v5e:2x2
jax: 0.10.0
libtpu: 0.0.40
codegen_flags: <defaults>
</compile_context>

<pallas_src>
import functools

import jax
import jax.numpy as jnp
from jax.experimental import pallas as pl
from jax.experimental.pallas import tpu as pltpu

LANES = 128
MAX_TILE_ROWS = 2048  # (2048,128) f32 tile = 1 MiB; 2 inputs x 2 buffers = 4 MiB VMEM


def _l1_partial_kernel(o_ref, t_ref, out_ref, *, total_rows, tile_rows, needs_mask):
    """Sum |o - t| over one (tile_rows, 128) tile into an (8, 128) partial."""
    # Elementwise math in f32 (VPU has slack in a mem-bound stream; also keeps
    # v5e happy, which has no bf16 VALU).
    diff = o_ref[...].astype(jnp.float32) - t_ref[...].astype(jnp.float32)
    absd = jnp.abs(diff)

    if needs_mask:
        # The last tile may extend past the real rows; Pallas pads that block
        # with unspecified data, so zero those rows before reducing.
        row_ids = jax.lax.broadcasted_iota(jnp.int32, absd.shape, 0)
        global_rows = row_ids + pl.program_id(0) * tile_rows
        absd = jnp.where(global_rows < total_rows, absd, jnp.float32(0.0))

    # Reduce (tile_rows, 128) -> (8, 128) with sublane-group-aligned vreg adds
    # (VPU only; the single cross-lane/sublane reduce happens once, in JAX).
    psum = jnp.sum(absd.reshape(tile_rows // 8, 8, LANES), axis=0)
    out_ref[0] = psum


def age_l1_loss(output, target, *, max_tile_rows=MAX_TILE_ROWS):
    """Pallas equivalent of nn.L1Loss(size_average=True)(output, target)."""
    assert output.shape == target.shape, "output/target shapes must match"
    n_elems = output.size

    o_flat = output.reshape(-1)
    t_flat = target.reshape(-1)

    # Sublane alignment for the dtype: 8 rows (f32), 16 (bf16), 32 (int8/fp8).
    itemsize = jnp.dtype(output.dtype).itemsize
    row_align = {4: 8, 2: 16, 1: 32}.get(itemsize, 8)
    pad_unit = row_align * LANES

    padded = pl.cdiv(n_elems, pad_unit) * pad_unit
    if padded != n_elems:
        # Identical zero padding on both -> contributes 0 to |o - t|.
        # TODO(synk): for sizes not aligned to row_align*128 this is one extra HBM
        # copy of each input; removing it needs a manual-DMA ragged tail path.
        o_flat = jnp.pad(o_flat, (0, padded - n_elems))
        t_flat = jnp.pad(t_flat, (0, padded - n_elems))

    rows = padded // LANES
    o2d = o_flat.reshape(rows, LANES)
    t2d = t_flat.reshape(rows, LANES)

    tile_rows = min(max_tile_rows, rows)
    assert tile_rows % row_align == 0
    num_tiles = pl.cdiv(rows, tile_rows)
    needs_mask = (rows % tile_rows) != 0

    kernel = functools.partial(
        _l1_partial_kernel,
        total_rows=rows,
        tile_rows=tile_rows,
        needs_mask=needs_mask,
    )

    partials = pl.pallas_call(
        kernel,
        out_shape=jax.ShapeDtypeStruct((num_tiles, 8, LANES), jnp.float32),
        grid_spec=pltpu.PrefetchScalarGridSpec(
            num_scalar_prefetch=0,
            grid=(num_tiles,),
            in_specs=[
                pl.BlockSpec((tile_rows, LANES), lambda i: (i, 0)),
                pl.BlockSpec((tile_rows, LANES), lambda i: (i, 0)),
            ],
            out_specs=pl.BlockSpec((1, 8, LANES), lambda i: (i, 0, 0)),
        ),
        compiler_params=pltpu.CompilerParams(
            dimension_semantics=("parallel",),
        ),
    )(o2d, t2d)

    total = jnp.sum(partials)                 # tiny final cross-lane reduce in JAX
    mean = total / jnp.float32(n_elems)
    return mean.astype(output.dtype)


if __name__ == "__main__":
    key = jax.random.PRNGKey(0)
    k1, k2, k3, k4 = jax.random.split(key, 4)

    # Primary: age-regression style (N, C, H, W) -> single-tile fast path.
    shape = (2, 4, 16, 16)
    out1 = jax.random.normal(k1, shape, dtype=jnp.float32) * 10.0 + 30.0
    tgt1 = jax.random.normal(k2, shape, dtype=jnp.float32) * 10.0 + 30.0
    loss1 = age_l1_loss(out1, tgt1)
    jax.block_until_ready(loss1)
    ref1 = jnp.mean(jnp.abs(out1 - tgt1))
    assert jnp.allclose(loss1, ref1, rtol=1e-5, atol=1e-5), (loss1, ref1)

    # Secondary: exercise multi-tile + ragged (masked) last block via a small
    # max_tile_rows override: 3072 elems -> 24 rows, tile_rows=16, 2 tiles.
    shape2 = (2, 3, 16, 32)
    out2 = jax.random.normal(k3, shape2, dtype=jnp.float32) * 5.0 + 20.0
    tgt2 = jax.random.normal(k4, shape2, dtype=jnp.float32) * 5.0 + 20.0
    loss2 = age_l1_loss(out2, tgt2, max_tile_rows=16)
    jax.block_until_ready(loss2)
    ref2 = jnp.mean(jnp.abs(out2 - tgt2))
    assert jnp.allclose(loss2, ref2, rtol=1e-5, atol=1e-5), (loss2, ref2)

    print("KERNEL_OK")
</pallas_src>

<mosaic_0001>
module attributes {stable_mosaic.version = 11 : i64} {
  func.func @_l1_partial_kernel(%arg0: i32, %arg1: memref<16x128xf32, #tpu.memory_space<vmem>>, %arg2: memref<16x128xf32, #tpu.memory_space<vmem>>, %arg3: memref<1x8x128xf32, #tpu.memory_space<vmem>>) attributes {dimension_semantics = [#tpu.dimension_semantics<parallel>], iteration_bounds = array<i64: 1>, scalar_prefetch = 0 : i64, scratch_operands = 0 : i64, tpu.core_type = #tpu.core_type<tc>, window_params = [{transform_indices = @transform_0, window_bounds = array<i64: 16, 128>}, {transform_indices = @transform_1, window_bounds = array<i64: 16, 128>}, {transform_indices = @transform_2, window_bounds = array<i64: 1, 8, 128>}]} {
    %c0 = arith.constant 0 : index
    %c0_0 = arith.constant 0 : index
    %0 = vector.load %arg1[%c0, %c0_0] : memref<16x128xf32, #tpu.memory_space<vmem>>, vector<16x128xf32>
    %c0_1 = arith.constant 0 : index
    %c0_2 = arith.constant 0 : index
    %1 = vector.load %arg2[%c0_1, %c0_2] : memref<16x128xf32, #tpu.memory_space<vmem>>, vector<16x128xf32>
    %2 = arith.subf %0, %1 : vector<16x128xf32>
    %3 = math.absf %2 : vector<16x128xf32>
    %4 = vector.shape_cast %3 : vector<16x128xf32> to vector<2x8x128xf32>
    %cst = arith.constant dense<0.000000e+00> : vector<8x128xf32>
    %5 = vector.multi_reduction <add>, %4, %cst [0] : vector<2x8x128xf32> to vector<8x128xf32>
    %c0_3 = arith.constant 0 : index
    %c0_4 = arith.constant 0 : index
    %c0_5 = arith.constant 0 : index
    %6 = vector.load %arg3[%c0_3, %c0_4, %c0_5] : memref<1x8x128xf32, #tpu.memory_space<vmem>>, vector<1x8x128xf32>
    %7 = vector.shape_cast %6 : vector<1x8x128xf32> to vector<8x128xf32>
    %8 = vector.shape_cast %5 : vector<8x128xf32> to vector<1x8x128xf32>
    tpu.vector_store %arg3[%c0_3, %c0_4, %c0_5], %8 {strides = array<i32>} : memref<1x8x128xf32, #tpu.memory_space<vmem>>, vector<1x8x128xf32>,
    return
  }
  func.func @transform_0(%arg0: i32) -> (i32, i32) {
    %c0_i32 = arith.constant 0 : i32
    %c0_i32_0 = arith.constant 0 : i32
    return %arg0, %c0_i32 : i32, i32
  }
  func.func @transform_1(%arg0: i32) -> (i32, i32) {
    %c0_i32 = arith.constant 0 : i32
    %c0_i32_0 = arith.constant 0 : i32
    return %arg0, %c0_i32 : i32, i32
  }
  func.func @transform_2(%arg0: i32) -> (i32, i32, i32) {
    %c0_i32 = arith.constant 0 : i32
    %c0_i32_0 = arith.constant 0 : i32
    %c0_i32_1 = arith.constant 0 : i32
    return %arg0, %c0_i32, %c0_i32_0 : i32, i32, i32
  }
}

</mosaic_0001>

<llo_original>
// kernel: tpu_custom_call.1
$region0: #{tpu_custom_call.1}
  #allocation0 [shape = 'u32[]', space=smem, size = 0x4, offset = 0x4, fixed_abs, tag = 'smem constant byte address 0x4 - core index']
  #allocation1 [shape = 'u32[72,128]{1,0:T(1,128)}', space=vmem, size = 0x9000, scoped, tag = 'internal scratch']
  %s0 = inlined_call_operand.hbm [shape: f32[16,128], index: 0, kind: input, shape index: {}]
  %s1 = inlined_call_operand.hbm [shape: f32[16,128], index: 1, kind: input, shape index: {}]
  %s2 = inlined_call_operand.hbm [shape: f32[1,8,128], index: 2, kind: output, shape index: {}]
  %s3 = sld [smem:[#allocation0]]
  $region26: #{tpu_custom_call.1} parent=0
    _
  %s5 = ssub.s32 1, %s3
  %s6 = scalar_select 0, %s5, %s3
  $region1: #{tpu_custom_call.1} parent=0
    #allocation2 [shape = 'u8[8192]{0}', space=vmem, size = 0x2000, scoped, tag = 'input window, operand 0, single buffered']
    #allocation3 [shape = 's32[1]{0}', space=sflag, size = 0x4, scoped, tag = 'scoped memory for tpu_custom_call.1']
    #allocation4 [shape = 's32[1]{0}', space=sflag, size = 0x4, scoped, tag = 'scoped memory for tpu_custom_call.1']
    #allocation5 [shape = 'u8[8192]{0}', space=vmem, size = 0x2000, scoped, tag = 'input window, operand 1, single buffered']
    #allocation6 [shape = 's32[1]{0}', space=sflag, size = 0x4, scoped, tag = 'scoped memory for tpu_custom_call.1']
    #allocation7 [shape = 'u8[4096]{0}', space=vmem, size = 0x1000, scoped, tag = 'output window, operand 0, single buffered']
    %7 = vsyncpa [#allocation3], 0
    %8 = vsyncpa [#allocation6], 0
    %9 = vsyncpa [#allocation4], 0
    // Predicated region
    $region2: #{tpu_custom_call.1} parent=1 // pred_check
      _
    $region3: #{tpu_custom_call.1} parent=1 // pred_check_branch
      %11 = sbr.rel (0) target = $region5
    $region4: #{tpu_custom_call.1} parent=1 // pred_region
      %13 = vsyncadd [#allocation3], 0
      %s14 = sshll.u32 %s0, 4
      %s15 = int_to_ptr.hbm [resolvable:$true] %s14
      %s16 = sshll.u32 [#allocation2], 4
      %s17 = int_to_ptr.vmem [resolvable:$true] %s16
      %22 = dma.hbm_to_vmem [thread:$0]  %s15, 256, %s17, [#allocation3], 128, 128, 8
    $region5: #{tpu_custom_call.1} parent=1 // pred_fallthru
      _
    // Predicated region
    $region6: #{tpu_custom_call.1} parent=1 // pred_check
      _
    $region7: #{tpu_custom_call.1} parent=1 // pred_check_branch
      %24 = sbr.rel (0) target = $region9
    $region8: #{tpu_custom_call.1} parent=1 // pred_region
      %26 = vsyncadd [#allocation6], 0
      %s27 = sshll.u32 %s1, 4
      %s28 = int_to_ptr.hbm [resolvable:$true] %s27
      %s29 = sshll.u32 [#allocation5], 4
      %s30 = int_to_ptr.vmem [resolvable:$true] %s29
      %35 = dma.hbm_to_vmem [thread:$0]  %s28, 256, %s30, [#allocation6], 128, 128, 8
    $region9: #{tpu_custom_call.1} parent=1 // pred_fallthru
      _
    // Predicated region
    $region10: #{tpu_custom_call.1} parent=1 // pred_check
      _
    $region11: #{tpu_custom_call.1} parent=1 // pred_check_branch
      %37 = sbr.rel (0) target = $region13
    $region12: #{tpu_custom_call.1} parent=1 // pred_region
      %39 = dma.done [#allocation3], 256
    $region13: #{tpu_custom_call.1} parent=1 // pred_fallthru
      _
    // Predicated region
    $region14: #{tpu_custom_call.1} parent=1 // pred_check
      _
    $region15: #{tpu_custom_call.1} parent=1 // pred_check_branch
      %41 = sbr.rel (0) target = $region17
    $region16: #{tpu_custom_call.1} parent=1 // pred_region
      %43 = dma.done [#allocation6], 256
    $region17: #{tpu_custom_call.1} parent=1 // pred_fallthru
      _
    %v44 = vld [vmem:[#allocation2] sm:$0xff]
    %v45 = vld [vmem:[#allocation2 + $0x8] sm:$0xff]
    %v46 = vld [vmem:[#allocation5] sm:$0xff]
    %v47 = vld [vmem:[#allocation5 + $0x8] sm:$0xff]
    %v48 = vsub.f32 %v44, %v46
    %v49 = vsub.f32 %v45, %v47
    %v50 = vand.u32 2147483647, %v48
    %v51 = vand.u32 2147483647, %v49
    %v52 = vadd.f32 %v50, %v51
    %53 = vst [vmem:[#allocation7] sm:$0xff] %v52
    // Predicated region
    $region18: #{tpu_custom_call.1} parent=1 // pred_check
      _
    $region19: #{tpu_custom_call.1} parent=1 // pred_check_branch
      %55 = sbr.rel (0) target = $region21
    $region20: #{tpu_custom_call.1} parent=1 // pred_region
      %57 = vsyncadd [#allocation4], 0
      %s59 = sshll.u32 [#allocation7], 4
      %s60 = int_to_ptr.vmem [resolvable:$true] %s59
      %s61 = sshll.u32 %s2, 4
      %s62 = int_to_ptr.hbm [resolvable:$true] %s61
      %64 = dma.vmem_to_hbm [thread:$0]  %s60, 128, %s62, [#allocation4]
    $region21: #{tpu_custom_call.1} parent=1 // pred_fallthru
      _
    // Predicated region
    $region22: #{tpu_custom_call.1} parent=1 // pred_check
      _
    $region23: #{tpu_custom_call.1} parent=1 // pred_check_branch
      %66 = sbr.rel (0) target = $region25
    $region24: #{tpu_custom_call.1} parent=1 // pred_region
      %68 = dma.done [#allocation4], 128
    $region25: #{tpu_custom_call.1} parent=1 // pred_fallthru
      _
    %69 = vsyncpa [#allocation3], 1
    %70 = vsyncpa [#allocation6], 1
    %71 = vsyncpa [#allocation4], 1

</llo_original>
